<compile_context>
chip_gen: v7x
topology: tpu7x:2x2x1
jax: 0.10.0
libtpu: 0.0.40
codegen_flags: <defaults>
</compile_context>

<pallas_src>
import functools
import math

import jax
import jax.numpy as jnp
import numpy as np
from jax.experimental import pallas as pl
from jax.experimental.pallas import tpu as pltpu


def _cnn_kernel(k, pool_k, C_in, H, TN, TNH_pad, CKK, CKK_pad,
                w_ref, xt_hbm, o_ref, img_ref, r_ref, sem):
    """One grid step: windowed DMA -> in-kernel im2col -> one fused MXU matmul
    -> pool-max (f32) -> single truncating int32 cast."""
    # (0) DMA this tile's de-interleaved image window (incl. halo) HBM -> VMEM.
    start = pl.multiple_of(pl.program_id(0) * TN, 128)
    cp = pltpu.make_async_copy(xt_hbm.at[:, pl.ds(start, TNH_pad)], img_ref, sem)
    cp.start()

    # (1) RHS padding rows: row CKK is the bias ones-row; rows above it only
    #     ever meet zero weight columns (so 1.0 is fine there too).  Rows
    #     [0, CKK) are fully rewritten in (2) every step -> no full-scratch
    #     iota/where re-init.
    r_ref[pl.ds(CKK, CKK_pad - CKK), :] = jnp.ones(
        (CKK_pad - CKK, pool_k * TN), jnp.float32)

    cp.wait()

    # (2) in-kernel im2col straight from the VMEM-resident de-interleaved
    #     image slab.  RHS columns enumerate (w_pool, h) with h minor; RHS
    #     rows enumerate (dh, dw, c) with c minor, so every copy below is a
    #     multi-sublane (C_in rows), lane-contiguous slice at a STATIC offset
    #     (no dynamic lane math, no in-kernel reshapes).
    for j in range(pool_k):                      # pool offset -> lane slab j*TN..
        for dh in range(k):
            for dw in range(k):
                p, q = (j + dw) % pool_k, (j + dw) // pool_k
                base = (dh * k + dw) * C_in
                r_ref[pl.ds(base, C_in), pl.ds(j * TN, TN)] = img_ref[
                    pl.ds(p * C_in, C_in), pl.ds(q * H + dh, TN)]

    # (3) one MXU call over all pool offsets (bias folded as ones-rows),
    #     MaxPool1d as a VPU max between 128-aligned lane slabs (still f32),
    #     then a single torch-style truncating cast to int32.
    acc = jnp.dot(w_ref[...], r_ref[...], preferred_element_type=jnp.float32)
    res = acc[:, :TN]
    for j in range(1, pool_k):
        res = jnp.maximum(res, acc[:, j * TN:(j + 1) * TN])
    o_ref[...] = res.astype(jnp.int32)


def cnn_forward(x, weight, bias, conv_k, pool_k, vmem_budget_bytes=16 << 20):
    """Pallas implementation of CNN.forward -> int32 (O, H_out, W_pool)."""
    B, C, L = x.shape
    O, C_in, kh, kw = weight.shape
    k = conv_k
    assert B % 4 == 0 and B // 4 == C_in and kh == k and kw == k

    H, W = C, 4 * L
    H_out, W_out = H - k + 1, W - k + 1
    W_pool = W_out // pool_k
    assert H_out > 0 and W_pool > 0

    # ---- tiling parameters -------------------------------------------------
    PC = pool_k * C_in                           # sublanes of de-interleaved img
    PC_pad = -(-PC // 8) * 8                     # vreg-granular sublanes
    CKK = C_in * k * k
    CKK_pad = -(-(CKK + 1) // 8) * 8             # +1 bias row, pad to sublanes
    O_pad = -(-O // 8) * 8
    q_max = (pool_k + k - 2) // pool_k
    halo = q_max * H + (k - 1)                   # extra source lanes per tile

    TN_unit = (H * 128) // math.gcd(H, 128)      # lcm(H, 128)
    lanes_needed = W_pool * H
    m_full = -(-lanes_needed // TN_unit)         # units to cover W_pool in 1 step
    # cap TN by a conservative VMEM budget (safe even for v7x's 64 MiB VMEM,
    # and under the 32 MiB scoped limit we request below)
    per_lane_bytes = 4 * (PC_pad + CKK_pad * pool_k + 2 * O_pad)
    m_cap = max(1, vmem_budget_bytes // (per_lane_bytes * TN_unit))
    TN = min(m_full, m_cap) * TN_unit            # lane-dense tile width (x128)
    tpw = TN // H                                # pooled columns per grid step
    n_tiles = -(-W_pool // tpw)
    TNH_pad = -(-(TN + halo) // 128) * 128       # per-step source window (lanes)
    L_src = (n_tiles - 1) * TN + TNH_pad         # total source lanes ever read
    Wq_build = max(-(-L_src // H), -(-W // pool_k))

    # ---- glue: de-interleave + transpose the RAW image (size ~|x|, no k^2
    #      im2col, no halo duplication) --------------------------------------
    # xt[p, c, wq, h] = x[c, h, wq*pool_k + p]; flattened (wq, h)-major so any
    # im2col row is one contiguous lane slice inside the kernel.
    x_r = x.reshape(C_in, H, W).astype(jnp.float32)
    x_w = jnp.pad(x_r, ((0, 0), (0, 0), (0, Wq_build * pool_k - W)))
    xt = jnp.transpose(x_w.reshape(C_in, H, Wq_build, pool_k), (3, 0, 2, 1))
    xt_flat = jnp.pad(xt.reshape(PC, Wq_build * H), ((0, PC_pad - PC), (0, 0)))

    # ---- weights: OIHW -> rows ordered (dh, dw, c), bias as extra col, pad --
    w_mat = jnp.transpose(weight, (0, 2, 3, 1)).reshape(O, CKK)
    w_aug = jnp.concatenate(
        [w_mat.astype(jnp.float32), bias.reshape(O, 1).astype(jnp.float32)],
        axis=1)
    w_aug = jnp.pad(w_aug, ((0, O_pad - O), (0, CKK_pad - (CKK + 1))))

    out = pl.pallas_call(
        functools.partial(_cnn_kernel, k, pool_k, C_in, H, TN, TNH_pad,
                          CKK, CKK_pad),
        out_shape=jax.ShapeDtypeStruct((O_pad, n_tiles * TN), jnp.int32),
        grid=(n_tiles,),
        in_specs=[
            pl.BlockSpec((O_pad, CKK_pad), lambda i: (0, 0)),  # weights: resident
            pl.BlockSpec(memory_space=pl.ANY),                 # image stays in HBM
        ],
        out_specs=pl.BlockSpec((O_pad, TN), lambda i: (0, i)), # 128-multiple lanes
        scratch_shapes=[
            pltpu.VMEM((PC_pad, TNH_pad), jnp.float32),        # image window
            pltpu.VMEM((CKK_pad, pool_k * TN), jnp.float32),   # im2col RHS
            pltpu.SemaphoreType.DMA(()),
        ],
        compiler_params=pltpu.CompilerParams(
            dimension_semantics=("parallel",),     # v7x: tiles shard across 2 TCs
            vmem_limit_bytes=32 * 1024 * 1024),    # v5e scoped default is 16 MiB
    )(w_aug, xt_flat)

    # ---- tiny int32 post-processing: drop padding, restore (O, H_out, W_pool)
    out = out[:O].reshape(O, n_tiles * tpw, H)[:, :W_pool, :H_out]
    return jnp.transpose(out, (0, 2, 1))


def ref_forward(x, weight, bias, conv_k, pool_k):
    """Pure-JAX reference mirroring the PyTorch forward."""
    B, C, L = x.shape
    C_in = B // 4
    x_r = x.reshape(C_in, C, 4 * L)[None]
    conv = jax.lax.conv_general_dilated(
        x_r, weight, window_strides=(1, 1), padding="VALID",
        dimension_numbers=("NCHW", "OIHW", "NCHW"))[0] + bias[:, None, None]
    conv = conv.astype(jnp.int32)
    O, H_out, W_out = conv.shape
    W_pool = W_out // pool_k
    return conv[:, :, :W_pool * pool_k].reshape(O, H_out, W_pool, pool_k).max(-1)


if __name__ == "__main__":
    # CNN(input_channel=2, output_size=8, cnnConvKernel=3, cnnPoolKernel=2)
    input_channel, output_size, conv_k, pool_k = 2, 8, 3, 2
    B, C, L = 4 * input_channel, 16, 8                    # x: (8, 16, 8)

    key = jax.random.PRNGKey(0)
    kx, kw, kb = jax.random.split(key, 3)
    x = jax.random.normal(kx, (B, C, L), dtype=jnp.float32) * 3.0
    bound = 1.0 / np.sqrt(input_channel * conv_k * conv_k)  # torch default init
    weight = jax.random.uniform(kw, (output_size, input_channel, conv_k, conv_k),
                                dtype=jnp.float32, minval=-bound, maxval=bound)
    bias = jax.random.uniform(kb, (output_size,), dtype=jnp.float32,
                              minval=-bound, maxval=bound)

    out = jax.block_until_ready(cnn_forward(x, weight, bias, conv_k, pool_k))
    ref = jax.block_until_ready(ref_forward(x, weight, bias, conv_k, pool_k))

    assert out.shape == ref.shape == (output_size, C - conv_k + 1,
                                      (4 * L - conv_k + 1) // pool_k)
    assert out.dtype == jnp.int32
    # tolerate off-by-one from float rounding exactly at the int truncation edge
    assert int(jnp.max(jnp.abs(out - ref))) <= 1, "mismatch vs reference"
    print("KERNEL_OK")
</pallas_src>

<mosaic_0001>
module attributes {stable_mosaic.version = 11 : i64} {
  func.func @_cnn_kernel(%arg0: i32, %arg1: memref<8x24xf32, #tpu.memory_space<vmem>>, %arg2: memref<8x384xf32, #tpu.memory_space<any>>, %arg3: memref<8x256xi32, #tpu.memory_space<vmem>>, %arg4: memref<8x384xf32, #tpu.memory_space<vmem>>, %arg5: memref<24x512xf32, #tpu.memory_space<vmem>>, %arg6: memref<!tpu.dma_semaphore, #tpu.memory_space<semaphore_mem>>) attributes {dimension_semantics = [#tpu.dimension_semantics<parallel>], iteration_bounds = array<i64: 1>, scalar_prefetch = 0 : i64, scratch_operands = 3 : i64, tpu.core_type = #tpu.core_type<tc>, window_params = [{pipeline_mode = #tpu.pipeline_mode<synchronous>, transform_indices = @transform_0, window_bounds = array<i64: 8, 24>}, {}, {transform_indices = @transform_2, window_bounds = array<i64: 8, 256>}]} {
    %c256_i32 = arith.constant 256 : i32
    %0 = arith.muli %arg0, %c256_i32 : i32
    %1 = tpu.assume_multiple %0, 128 : i32
    %c0_i32 = arith.constant 0 : i32
    %2 = tpu.memref_slice %arg2[%c0_i32, %1] : memref<8x384xf32, #tpu.memory_space<any>> -> memref<8x384xf32, #tpu.memory_space<any>>
    tpu.enqueue_dma source(%2 : memref<8x384xf32, #tpu.memory_space<any>>) target(%arg4 : memref<8x384xf32, #tpu.memory_space<vmem>>) target_semaphore(%arg6 : memref<!tpu.dma_semaphore, #tpu.memory_space<semaphore_mem>>)
    %cst = arith.constant 1.000000e+00 : f32
    %3 = vector.broadcast %cst : f32 to vector<6x512xf32>
    %c18 = arith.constant 18 : index
    %c0 = arith.constant 0 : index
    %4 = vector.load %arg5[%c18, %c0] : memref<24x512xf32, #tpu.memory_space<vmem>>, vector<6x512xf32>
    tpu.vector_store %arg5[%c18, %c0], %3 {strides = array<i32>} : memref<24x512xf32, #tpu.memory_space<vmem>>, vector<6x512xf32>,
    %c0_i32_0 = arith.constant 0 : i32
    %5 = tpu.memref_slice %arg2[%c0_i32_0, %1] : memref<8x384xf32, #tpu.memory_space<any>> -> memref<8x384xf32, #tpu.memory_space<any>>
    tpu.wait_dma2 semaphore(%arg6 : memref<!tpu.dma_semaphore, #tpu.memory_space<semaphore_mem>>) src(%5 : memref<8x384xf32, #tpu.memory_space<any>>) dst(%arg4 : memref<8x384xf32, #tpu.memory_space<vmem>>)
    %c0_1 = arith.constant 0 : index
    %c0_2 = arith.constant 0 : index
    %6 = vector.load %arg4[%c0_1, %c0_2] : memref<8x384xf32, #tpu.memory_space<vmem>>, vector<2x256xf32>
    %c0_3 = arith.constant 0 : index
    %c0_4 = arith.constant 0 : index
    %7 = vector.load %arg5[%c0_3, %c0_4] : memref<24x512xf32, #tpu.memory_space<vmem>>, vector<2x256xf32>
    tpu.vector_store %arg5[%c0_3, %c0_4], %6 {strides = array<i32>} : memref<24x512xf32, #tpu.memory_space<vmem>>, vector<2x256xf32>,
    %c2 = arith.constant 2 : index
    %c0_5 = arith.constant 0 : index
    %8 = vector.load %arg4[%c2, %c0_5] : memref<8x384xf32, #tpu.memory_space<vmem>>, vector<2x256xf32>
    %c2_6 = arith.constant 2 : index
    %c0_7 = arith.constant 0 : index
    %9 = vector.load %arg5[%c2_6, %c0_7] : memref<24x512xf32, #tpu.memory_space<vmem>>, vector<2x256xf32>
    tpu.vector_store %arg5[%c2_6, %c0_7], %8 {strides = array<i32>} : memref<24x512xf32, #tpu.memory_space<vmem>>, vector<2x256xf32>,
    %c0_8 = arith.constant 0 : index
    %c16 = arith.constant 16 : index
    %10 = vector.load %arg4[%c0_8, %c16] : memref<8x384xf32, #tpu.memory_space<vmem>>, vector<2x256xf32>
    %c4 = arith.constant 4 : index
    %c0_9 = arith.constant 0 : index
    %11 = vector.load %arg5[%c4, %c0_9] : memref<24x512xf32, #tpu.memory_space<vmem>>, vector<2x256xf32>
    tpu.vector_store %arg5[%c4, %c0_9], %10 {strides = array<i32>} : memref<24x512xf32, #tpu.memory_space<vmem>>, vector<2x256xf32>,
    %c0_10 = arith.constant 0 : index
    %c1 = arith.constant 1 : index
    %12 = vector.load %arg4[%c0_10, %c1] : memref<8x384xf32, #tpu.memory_space<vmem>>, vector<2x256xf32>
    %c6 = arith.constant 6 : index
    %c0_11 = arith.constant 0 : index
    %13 = vector.load %arg5[%c6, %c0_11] : memref<24x512xf32, #tpu.memory_space<vmem>>, vector<2x256xf32>
    tpu.vector_store %arg5[%c6, %c0_11], %12 {strides = array<i32>} : memref<24x512xf32, #tpu.memory_space<vmem>>, vector<2x256xf32>,
    %c2_12 = arith.constant 2 : index
    %c1_13 = arith.constant 1 : index
    %14 = vector.load %arg4[%c2_12, %c1_13] : memref<8x384xf32, #tpu.memory_space<vmem>>, vector<2x256xf32>
    %c8 = arith.constant 8 : index
    %c0_14 = arith.constant 0 : index
    %15 = vector.load %arg5[%c8, %c0_14] : memref<24x512xf32, #tpu.memory_space<vmem>>, vector<2x256xf32>
    tpu.vector_store %arg5[%c8, %c0_14], %14 {strides = array<i32>} : memref<24x512xf32, #tpu.memory_space<vmem>>, vector<2x256xf32>,
    %c0_15 = arith.constant 0 : index
    %c17 = arith.constant 17 : index
    %16 = vector.load %arg4[%c0_15, %c17] : memref<8x384xf32, #tpu.memory_space<vmem>>, vector<2x256xf32>
    %c10 = arith.constant 10 : index
    %c0_16 = arith.constant 0 : index
    %17 = vector.load %arg5[%c10, %c0_16] : memref<24x512xf32, #tpu.memory_space<vmem>>, vector<2x256xf32>
    tpu.vector_store %arg5[%c10, %c0_16], %16 {strides = array<i32>} : memref<24x512xf32, #tpu.memory_space<vmem>>, vector<2x256xf32>,
    %c0_17 = arith.constant 0 : index
    %c2_18 = arith.constant 2 : index
    %18 = vector.load %arg4[%c0_17, %c2_18] : memref<8x384xf32, #tpu.memory_space<vmem>>, vector<2x256xf32>
    %c12 = arith.constant 12 : index
    %c0_19 = arith.constant 0 : index
    %19 = vector.load %arg5[%c12, %c0_19] : memref<24x512xf32, #tpu.memory_space<vmem>>, vector<2x256xf32>
    tpu.vector_store %arg5[%c12, %c0_19], %18 {strides = array<i32>} : memref<24x512xf32, #tpu.memory_space<vmem>>, vector<2x256xf32>,
    %c2_20 = arith.constant 2 : index
    %c2_21 = arith.constant 2 : index
    %20 = vector.load %arg4[%c2_20, %c2_21] : memref<8x384xf32, #tpu.memory_space<vmem>>, vector<2x256xf32>
    %c14 = arith.constant 14 : index
    %c0_22 = arith.constant 0 : index
    %21 = vector.load %arg5[%c14, %c0_22] : memref<24x512xf32, #tpu.memory_space<vmem>>, vector<2x256xf32>
    tpu.vector_store %arg5[%c14, %c0_22], %20 {strides = array<i32>} : memref<24x512xf32, #tpu.memory_space<vmem>>, vector<2x256xf32>,
    %c0_23 = arith.constant 0 : index
    %c18_24 = arith.constant 18 : index
    %22 = vector.load %arg4[%c0_23, %c18_24] : memref<8x384xf32, #tpu.memory_space<vmem>>, vector<2x256xf32>
    %c16_25 = arith.constant 16 : index
    %c0_26 = arith.constant 0 : index
    %23 = vector.load %arg5[%c16_25, %c0_26] : memref<24x512xf32, #tpu.memory_space<vmem>>, vector<2x256xf32>
    tpu.vector_store %arg5[%c16_25, %c0_26], %22 {strides = array<i32>} : memref<24x512xf32, #tpu.memory_space<vmem>>, vector<2x256xf32>,
    %c2_27 = arith.constant 2 : index
    %c0_28 = arith.constant 0 : index
    %24 = vector.load %arg4[%c2_27, %c0_28] : memref<8x384xf32, #tpu.memory_space<vmem>>, vector<2x256xf32>
    %c0_29 = arith.constant 0 : index
    %c256 = arith.constant 256 : index
    %25 = vector.load %arg5[%c0_29, %c256] : memref<24x512xf32, #tpu.memory_space<vmem>>, vector<2x256xf32>
    tpu.vector_store %arg5[%c0_29, %c256], %24 {strides = array<i32>} : memref<24x512xf32, #tpu.memory_space<vmem>>, vector<2x256xf32>,
    %c0_30 = arith.constant 0 : index
    %c16_31 = arith.constant 16 : index
    %26 = vector.load %arg4[%c0_30, %c16_31] : memref<8x384xf32, #tpu.memory_space<vmem>>, vector<2x256xf32>
    %c2_32 = arith.constant 2 : index
    %c256_33 = arith.constant 256 : index
    %27 = vector.load %arg5[%c2_32, %c256_33] : memref<24x512xf32, #tpu.memory_space<vmem>>, vector<2x256xf32>
    tpu.vector_store %arg5[%c2_32, %c256_33], %26 {strides = array<i32>} : memref<24x512xf32, #tpu.memory_space<vmem>>, vector<2x256xf32>,
    %c2_34 = arith.constant 2 : index
    %c16_35 = arith.constant 16 : index
    %28 = vector.load %arg4[%c2_34, %c16_35] : memref<8x384xf32, #tpu.memory_space<vmem>>, vector<2x256xf32>
    %c4_36 = arith.constant 4 : index
    %c256_37 = arith.constant 256 : index
    %29 = vector.load %arg5[%c4_36, %c256_37] : memref<24x512xf32, #tpu.memory_space<vmem>>, vector<2x256xf32>
    tpu.vector_store %arg5[%c4_36, %c256_37], %28 {strides = array<i32>} : memref<24x512xf32, #tpu.memory_space<vmem>>, vector<2x256xf32>,
    %c2_38 = arith.constant 2 : index
    %c1_39 = arith.constant 1 : index
    %30 = vector.load %arg4[%c2_38, %c1_39] : memref<8x384xf32, #tpu.memory_space<vmem>>, vector<2x256xf32>
    %c6_40 = arith.constant 6 : index
    %c256_41 = arith.constant 256 : index
    %31 = vector.load %arg5[%c6_40, %c256_41] : memref<24x512xf32, #tpu.memory_space<vmem>>, vector<2x256xf32>
    tpu.vector_store %arg5[%c6_40, %c256_41], %30 {strides = array<i32>} : memref<24x512xf32, #tpu.memory_space<vmem>>, vector<2x256xf32>,
    %c0_42 = arith.constant 0 : index
    %c17_43 = arith.constant 17 : index
    %32 = vector.load %arg4[%c0_42, %c17_43] : memref<8x384xf32, #tpu.memory_space<vmem>>, vector<2x256xf32>
    %c8_44 = arith.constant 8 : index
    %c256_45 = arith.constant 256 : index
    %33 = vector.load %arg5[%c8_44, %c256_45] : memref<24x512xf32, #tpu.memory_space<vmem>>, vector<2x256xf32>
    tpu.vector_store %arg5[%c8_44, %c256_45], %32 {strides = array<i32>} : memref<24x512xf32, #tpu.memory_space<vmem>>, vector<2x256xf32>,
    %c2_46 = arith.constant 2 : index
    %c17_47 = arith.constant 17 : index
    %34 = vector.load %arg4[%c2_46, %c17_47] : memref<8x384xf32, #tpu.memory_space<vmem>>, vector<2x256xf32>
    %c10_48 = arith.constant 10 : index
    %c256_49 = arith.constant 256 : index
    %35 = vector.load %arg5[%c10_48, %c256_49] : memref<24x512xf32, #tpu.memory_space<vmem>>, vector<2x256xf32>
    tpu.vector_store %arg5[%c10_48, %c256_49], %34 {strides = array<i32>} : memref<24x512xf32, #tpu.memory_space<vmem>>, vector<2x256xf32>,
    %c2_50 = arith.constant 2 : index
    %c2_51 = arith.constant 2 : index
    %36 = vector.load %arg4[%c2_50, %c2_51] : memref<8x384xf32, #tpu.memory_space<vmem>>, vector<2x256xf32>
    %c12_52 = arith.constant 12 : index
    %c256_53 = arith.constant 256 : index
    %37 = vector.load %arg5[%c12_52, %c256_53] : memref<24x512xf32, #tpu.memory_space<vmem>>, vector<2x256xf32>
    tpu.vector_store %arg5[%c12_52, %c256_53], %36 {strides = array<i32>} : memref<24x512xf32, #tpu.memory_space<vmem>>, vector<2x256xf32>,
    %c0_54 = arith.constant 0 : index
    %c18_55 = arith.constant 18 : index
    %38 = vector.load %arg4[%c0_54, %c18_55] : memref<8x384xf32, #tpu.memory_space<vmem>>, vector<2x256xf32>
    %c14_56 = arith.constant 14 : index
    %c256_57 = arith.constant 256 : index
    %39 = vector.load %arg5[%c14_56, %c256_57] : memref<24x512xf32, #tpu.memory_space<vmem>>, vector<2x256xf32>
    tpu.vector_store %arg5[%c14_56, %c256_57], %38 {strides = array<i32>} : memref<24x512xf32, #tpu.memory_space<vmem>>, vector<2x256xf32>,
    %c2_58 = arith.constant 2 : index
    %c18_59 = arith.constant 18 : index
    %40 = vector.load %arg4[%c2_58, %c18_59] : memref<8x384xf32, #tpu.memory_space<vmem>>, vector<2x256xf32>
    %c16_60 = arith.constant 16 : index
    %c256_61 = arith.constant 256 : index
    %41 = vector.load %arg5[%c16_60, %c256_61] : memref<24x512xf32, #tpu.memory_space<vmem>>, vector<2x256xf32>
    tpu.vector_store %arg5[%c16_60, %c256_61], %40 {strides = array<i32>} : memref<24x512xf32, #tpu.memory_space<vmem>>, vector<2x256xf32>,
    %c0_62 = arith.constant 0 : index
    %c0_63 = arith.constant 0 : index
    %42 = vector.load %arg1[%c0_62, %c0_63] : memref<8x24xf32, #tpu.memory_space<vmem>>, vector<8x24xf32>
    %c0_64 = arith.constant 0 : index
    %c0_65 = arith.constant 0 : index
    %43 = vector.load %arg5[%c0_64, %c0_65] : memref<24x512xf32, #tpu.memory_space<vmem>>, vector<24x512xf32>
    %cst_66 = arith.constant dense<0.000000e+00> : vector<8x512xf32>
    %44 = tpu.matmul %42, %43, %cst_66 {dimension_numbers = #tpu.dot_dimension_numbers<[1], [0], [0], [1], [0, 0, 1, 1], [], []>} : vector<8x24xf32>, vector<24x512xf32>, vector<8x512xf32> -> vector<8x512xf32>
    %45 = vector.extract_strided_slice %44 {offsets = [0, 0], sizes = [8, 256], strides = [1, 1]} : vector<8x512xf32> to vector<8x256xf32>
    %46 = vector.extract_strided_slice %44 {offsets = [0, 256], sizes = [8, 256], strides = [1, 1]} : vector<8x512xf32> to vector<8x256xf32>
    %47 = arith.maximumf %45, %46 : vector<8x256xf32>
    %48 = arith.fptosi %47 : vector<8x256xf32> to vector<8x256xi32>
    %c0_67 = arith.constant 0 : index
    %c0_68 = arith.constant 0 : index
    %49 = vector.load %arg3[%c0_67, %c0_68] : memref<8x256xi32, #tpu.memory_space<vmem>>, vector<8x256xi32>
    tpu.vector_store %arg3[%c0_67, %c0_68], %48 {strides = array<i32>} : memref<8x256xi32, #tpu.memory_space<vmem>>, vector<8x256xi32>,
    return
  }
  func.func @transform_0(%arg0: i32) -> (i32, i32) {
    %c0_i32 = arith.constant 0 : i32
    %c0_i32_0 = arith.constant 0 : i32
    %c0_i32_1 = arith.constant 0 : i32
    return %c0_i32, %c0_i32_0 : i32, i32
  }
  func.func @transform_2(%arg0: i32) -> (i32, i32) {
    %c0_i32 = arith.constant 0 : i32
    %c0_i32_0 = arith.constant 0 : i32
    return %c0_i32, %arg0 : i32, i32
  }
}

</mosaic_0001>

<llo_original>
// kernel: tpu_custom_call.1
$region0: #{tpu_custom_call.1}
  #allocation0 [shape = 'u32[]', space=smem, size = 0x4, offset = 0x4, fixed_abs, tag = 'smem constant byte address 0x4 - core index']
  #allocation1 [shape = 'u32[144,128]{1,0:T(1,128)}', space=vmem, size = 0x12000, scoped, tag = 'internal scratch']
  #allocation2 [shape = 'f32[8,384]{1,0:T(8,128)}', space=vmem, size = 0x3000, scoped, tag = 'scratch operand']
  #allocation3 [shape = 'f32[24,512]{1,0:T(8,128)}', space=vmem, size = 0xc000, scoped, tag = 'scratch operand']
  #allocation4 [shape = 's32[1]{0}', space=sflag, size = 0x4, scoped, tag = 'scratch operand']
  #allocation9 [shape = 's32[]', space=sflag, size = 0x4, offset = 0, fixed_abs, tag = 'sflag constant byte address 0x0 - dummy sync flag']
  #allocation10 [shape = 's32[]', space=sflag, size = 0x4, offset = 0, fixed_abs, tag = 'sflag constant byte address 0x0 - dummy sync flag']
  #allocation11 [shape = 'u32[]', space=smem, size = 0x4, offset = 0x44, fixed_abs, tag = 'smem constant byte address 0x44 - assertion arg 0']
  #allocation12 [shape = 'u32[]', space=smem, size = 0x4, offset = 0x48, fixed_abs, tag = 'smem constant byte address 0x48 - assertion arg 1']
  %s0 = inlined_call_operand.hbm [shape: f32[8,24], index: 0, kind: input, shape index: {}]
  %s1 = inlined_call_operand.hbm [shape: f32[8,384], index: 1, kind: input, shape index: {}]
  %s2 = inlined_call_operand.hbm [shape: s32[8,256], index: 2, kind: output, shape index: {}]
  %s3 = sld [smem:[#allocation0]]
  $region22: #{tpu_custom_call.1} parent=0
    _
  %s5 = ssub.s32 1, %s3
  %s6 = scalar_select 0, %s5, %s3
  $region1: #{tpu_custom_call.1} parent=0
    #allocation5 [shape = 'u8[4096]{0}', space=vmem, size = 0x1000, scoped, tag = 'input window, operand 0, single buffered']
    #allocation6 [shape = 's32[1]{0}', space=sflag, size = 0x4, scoped, tag = 'scoped memory for tpu_custom_call.1']
    #allocation7 [shape = 's32[1]{0}', space=sflag, size = 0x4, scoped, tag = 'scoped memory for tpu_custom_call.1']
    #allocation8 [shape = 'u8[8192]{0}', space=vmem, size = 0x2000, scoped, tag = 'output window, operand 0, single buffered']
    %7 = vsyncpa [#allocation6], 0
    %8 = vsyncpa [#allocation7], 0
    // Predicated region
    $region2: #{tpu_custom_call.1} parent=1 // pred_check
      _
    $region3: #{tpu_custom_call.1} parent=1 // pred_check_branch
      %10 = sbr.rel (0) target = $region5
    $region4: #{tpu_custom_call.1} parent=1 // pred_region
      %s12 = ssub.s32 128, 128
      %13 = vsyncadd [#allocation6], %s12
      %s15 = sshll.u32 [#allocation5], 4
      %s16 = int_to_ptr.vmem [resolvable:$true] %s15
      %18 = dma.hbm_to_vmem [thread:$0]  %s0, 128, %s16, [#allocation6]
    $region5: #{tpu_custom_call.1} parent=1 // pred_fallthru
      _
    // Predicated region
    $region6: #{tpu_custom_call.1} parent=1 // pred_check
      _
    $region7: #{tpu_custom_call.1} parent=1 // pred_check_branch
      %20 = sbr.rel (0) target = $region9
    $region8: #{tpu_custom_call.1} parent=1 // pred_region
      %21 = dma.done [#allocation6], 128
    $region9: #{tpu_custom_call.1} parent=1 // pred_fallthru
      _
    %s22 = smul.u32 0, 256
    %s23 = sshra.s32 %s22, 7
    %s24 = sand.u32 %s22, 127
    %s25 = smul.addr %s23, 128
    %s26 = scalar_lea.hbm %s1, %s25
    // Predicated region
    $region10: #{tpu_custom_call.1} parent=1 // pred_check
      _
    $region11: #{tpu_custom_call.1} parent=1 // pred_check_branch
      %28 = sbr.rel target = $region13
    $region12: #{tpu_custom_call.1} parent=1 // pred_region
      %29 = sst [smem:[#allocation11]] [#allocation10]
      %30 = sst [smem:[#allocation12]] [#allocation9]
    $region13: #{tpu_custom_call.1} parent=1 // pred_fallthru
      _
    %32 = shalt.err (0)
    %s34 = sshll.u32 [#allocation2], 4
    %s35 = int_to_ptr.vmem [resolvable:$true] %s34
    %37 = dma.hbm_to_vmem [thread:$0]  %s26, 384, %s35, [#allocation4]
    %38 = vst [vmem:[#allocation3 + $0x40] sm:$0xfc] 1.0
    %39 = vst [vmem:[#allocation3 + $0x48] sm:$0xfc] 1.0
    %40 = vst [vmem:[#allocation3 + $0x50] sm:$0xfc] 1.0
    %41 = vst [vmem:[#allocation3 + $0x58] sm:$0xfc] 1.0
    %s42 = smul.u32 8, 1
    %s43 = smul.u32 %s42, 3
    %s44 = sshll.u32 %s43, 4
    %45 = dma.done [#allocation4], %s44
    %v46 = vld [vmem:[#allocation2] sm:$0x3]
    %v47 = vld [vmem:[#allocation2 + $0x8] sm:$0x3]
    %48 = vst [vmem:[#allocation3] sm:$0x3] %v46
    %49 = vst [vmem:[#allocation3 + $0x8] sm:$0x3] %v47
    %v50 = vld [vmem:[#allocation2] sm:$0xc]
    %v51 = vld [vmem:[#allocation2 + $0x8] sm:$0xc]
    %52 = vst [vmem:[#allocation3] sm:$0xc] %v50
    %53 = vst [vmem:[#allocation3 + $0x8] sm:$0xc] %v51
    %v54 = vld [vmem:[#allocation2] sm:$0x3]
    %v55 = vld [vmem:[#allocation2 + $0x8] sm:$0x3]
    %v56 = vld [vmem:[#allocation2 + $0x10] sm:$0x3]
    %v60 = vrot.slane %v54, 4
    %v61 = vrot.slane %v55, 4
    %v62 = vrot.slane %v56, 4
    %63 = vrot.lane.b32.xlu0 %v60, 112
    %v64 = vpop.permute.xlu0 %63
    %65 = vrot.lane.b32.xlu0 %v61, 112
    %v66 = vpop.permute.xlu0 %65
    %67 = vrot.lane.b32.xlu0 %v62, 112
    %v68 = vpop.permute.xlu0 %67
    %vm69 = vcmask 916480
    %v70 = vsel %vm69, %v64, %v66
    %v71 = vsel %vm69, %v66, %v68
    %74 = vst [vmem:[#allocation3] sm:$0x30] %v70
    %75 = vst [vmem:[#allocation3 + $0x8] sm:$0x30] %v71
    %v76 = vld [vmem:[#allocation2] sm:$0x3]
    %v77 = vld [vmem:[#allocation2 + $0x8] sm:$0x3]
    %v78 = vld [vmem:[#allocation2 + $0x10] sm:$0x3]
    %v82 = vrot.slane %v76, 2
    %v83 = vrot.slane %v77, 2
    %v84 = vrot.slane %v78, 2
    %85 = vrot.lane.b32.xlu0 %v82, 127
    %v86 = vpop.permute.xlu0 %85
    %87 = vrot.lane.b32.xlu0 %v83, 127
    %v88 = vpop.permute.xlu0 %87
    %89 = vrot.lane.b32.xlu0 %v84, 127
    %v90 = vpop.permute.xlu0 %89
    %vm91 = vcmask 1039360
    %v92 = vsel %vm91, %v86, %v88
    %v93 = vsel %vm91, %v88, %v90
    %96 = vst [vmem:[#allocation3] sm:$0xc0] %v92
    %97 = vst [vmem:[#allocation3 + $0x8] sm:$0xc0] %v93
    %v98 = vld [vmem:[#allocation2] sm:$0xc]
    %v99 = vld [vmem:[#allocation2 + $0x8] sm:$0xc]
    %v100 = vld [vmem:[#allocation2 + $0x10] sm:$0xc]
    %v104 = vrot.slane %v98, 2
    %v105 = vrot.slane %v99, 2
    %v106 = vrot.slane %v100, 2
    %107 = vrot.lane.b32.xlu0 %v104, 127
    %v108 = vpop.permute.xlu0 %107
    %109 = vrot.lane.b32.xlu0 %v105, 127
    %v110 = vpop.permute.xlu0 %109
    %111 = vrot.lane.b32.xlu0 %v106, 127
    %v112 = vpop.permute.xlu0 %111
    %v113 = vsel %vm91, %v108, %v110
    %v114 = vsel %vm91, %v110, %v112
    %117 = vst [vmem:[#allocation3 + $0x20] sm:$0x3] %v113
    %118 = vst [vmem:[#allocation3 + $0x28] sm:$0x3] %v114
    %v119 = vld [vmem:[#allocation2] sm:$0x3]
    %v120 = vld [vmem:[#allocation2 + $0x8] sm:$0x3]
    %v121 = vld [vmem:[#allocation2 + $0x10] sm:$0x3]
    %v125 = vrot.slane %v119, 6
    %v126 = vrot.slane %v120, 6
    %v127 = vrot.slane %v121, 6
    %128 = vrot.lane.b32.xlu0 %v125, 111
    %v129 = vpop.permute.xlu0 %128
    %130 = vrot.lane.b32.xlu0 %v126, 111
    %v131 = vpop.permute.xlu0 %130
    %132 = vrot.lane.b32.xlu0 %v127, 111
    %v133 = vpop.permute.xlu0 %132
    %vm134 = vcmask 908288
    %v135 = vsel %vm134, %v129, %v131
    %v136 = vsel %vm134, %v131, %v133
    %139 = vst [vmem:[#allocation3 + $0x20] sm:$0xc] %v135
    %140 = vst [vmem:[#allocation3 + $0x28] sm:$0xc] %v136
    %v141 = vld [vmem:[#allocation2] sm:$0x3]
    %v142 = vld [vmem:[#allocation2 + $0x8] sm:$0x3]
    %v143 = vld [vmem:[#allocation2 + $0x10] sm:$0x3]
    %v147 = vrot.slane %v141, 4
    %v148 = vrot.slane %v142, 4
    %v149 = vrot.slane %v143, 4
    %150 = vrot.lane.b32.xlu0 %v147, 126
    %v151 = vpop.permute.xlu0 %150
    %152 = vrot.lane.b32.xlu0 %v148, 126
    %v153 = vpop.permute.xlu0 %152
    %154 = vrot.lane.b32.xlu0 %v149, 126
    %v155 = vpop.permute.xlu0 %154
    %vm156 = vcmask 1031168
    %v157 = vsel %vm156, %v151, %v153
    %v158 = vsel %vm156, %v153, %v155
    %161 = vst [vmem:[#allocation3 + $0x20] sm:$0x30] %v157
    %162 = vst [vmem:[#allocation3 + $0x28] sm:$0x30] %v158
    %v163 = vld [vmem:[#allocation2] sm:$0xc]
    %v164 = vld [vmem:[#allocation2 + $0x8] sm:$0xc]
    %v165 = vld [vmem:[#allocation2 + $0x10] sm:$0xc]
    %v169 = vrot.slane %v163, 4
    %v170 = vrot.slane %v164, 4
    %v171 = vrot.slane %v165, 4
    %172 = vrot.lane.b32.xlu0 %v169, 126
    %v173 = vpop.permute.xlu0 %172
    %174 = vrot.lane.b32.xlu0 %v170, 126
    %v175 = vpop.permute.xlu0 %174
    %176 = vrot.lane.b32.xlu0 %v171, 126
    %v177 = vpop.permute.xlu0 %176
    %v178 = vsel %vm156, %v173, %v175
    %v179 = vsel %vm156, %v175, %v177
    %182 = vst [vmem:[#allocation3 + $0x20] sm:$0xc0] %v178
    %183 = vst [vmem:[#allocation3 + $0x28] sm:$0xc0] %v179
    %v184 = vld [vmem:[#allocation2] sm:$0x3]
    %v185 = vld [vmem:[#allocation2 + $0x8] sm:$0x3]
    %v186 = vld [vmem:[#allocation2 + $0x10] sm:$0x3]
    %190 = vrot.lane.b32.xlu0 %v184, 110
    %v191 = vpop.permute.xlu0 %190
    %192 = vrot.lane.b32.xlu0 %v185, 110
    %v193 = vpop.permute.xlu0 %192
    %194 = vrot.lane.b32.xlu0 %v186, 110
    %v195 = vpop.permute.xlu0 %194
    %vm196 = vcmask 900096
    %v197 = vsel %vm196, %v191, %v193
    %v198 = vsel %vm196, %v193, %v195
    %201 = vst [vmem:[#allocation3 + $0x40] sm:$0x3] %v197
    %202 = vst [vmem:[#allocation3 + $0x48] sm:$0x3] %v198
    %v203 = vld [vmem:[#allocation2] sm:$0xc]
    %v204 = vld [vmem:[#allocation2 + $0x8] sm:$0xc]
    %v207 = vrot.slane %v203, 2
    %v208 = vrot.slane %v204, 2
    %211 = vst [vmem:[#allocation3 + $0x10] sm:$0x3] %v207
    %212 = vst [vmem:[#allocation3 + $0x18] sm:$0x3] %v208
    %v213 = vld [vmem:[#allocation2] sm:$0x3]
    %v214 = vld [vmem:[#allocation2 + $0x8] sm:$0x3]
    %v215 = vld [vmem:[#allocation2 + $0x10] sm:$0x3]
    %v219 = vrot.slane %v213, 6
    %v220 = vrot.slane %v214, 6
    %v221 = vrot.slane %v215, 6
    %222 = vrot.lane.b32.xlu0 %v219, 112
    %v223 = vpop.permute.xlu0 %222
    %224 = vrot.lane.b32.xlu0 %v220, 112
    %v225 = vpop.permute.xlu0 %224
    %226 = vrot.lane.b32.xlu0 %v221, 112
    %v227 = vpop.permute.xlu0 %226
    %v228 = vsel %vm69, %v223, %v225
    %v229 = vsel %vm69, %v225, %v227
    %232 = vst [vmem:[#allocation3 + $0x10] sm:$0xc] %v228
    %233 = vst [vmem:[#allocation3 + $0x18] sm:$0xc] %v229
    %v234 = vld [vmem:[#allocation2] sm:$0xc]
    %v235 = vld [vmem:[#allocation2 + $0x8] sm:$0xc]
    %v236 = vld [vmem:[#allocation2 + $0x10] sm:$0xc]
    %v240 = vrot.slane %v234, 6
    %v241 = vrot.slane %v235, 6
    %v242 = vrot.slane %v236, 6
    %243 = vrot.lane.b32.xlu0 %v240, 112
    %v244 = vpop.permute.xlu0 %243
    %245 = vrot.lane.b32.xlu0 %v241, 112
    %v246 = vpop.permute.xlu0 %245
    %247 = vrot.lane.b32.xlu0 %v242, 112
    %v248 = vpop.permute.xlu0 %247
    %v249 = vsel %vm69, %v244, %v246
    %v250 = vsel %vm69, %v246, %v248
    %253 = vst [vmem:[#allocation3 + $0x10] sm:$0x30] %v249
    %254 = vst [vmem:[#allocation3 + $0x18] sm:$0x30] %v250
    %v255 = vld [vmem:[#allocation2] sm:$0xc]
    %v256 = vld [vmem:[#allocation2 + $0x8] sm:$0xc]
    %v257 = vld [vmem:[#allocation2 + $0x10] sm:$0xc]
    %v261 = vrot.slane %v255, 4
    %v262 = vrot.slane %v256, 4
    %v263 = vrot.slane %v257, 4
    %264 = vrot.lane.b32.xlu0 %v261, 127
    %v265 = vpop.permute.xlu0 %264
    %266 = vrot.lane.b32.xlu0 %v262, 127
    %v267 = vpop.permute.xlu0 %266
    %268 = vrot.lane.b32.xlu0 %v263, 127
    %v269 = vpop.permute.xlu0 %268
    %v270 = vsel %vm91, %v265, %v267
    %v271 = vsel %vm91, %v267, %v269
    %274 = vst [vmem:[#allocation3 + $0x10] sm:$0xc0] %v270
    %275 = vst [vmem:[#allocation3 + $0x18] sm:$0xc0] %v271
    %v276 = vld [vmem:[#allocation2] sm:$0x3]
    %v277 = vld [vmem:[#allocation2 + $0x8] sm:$0x3]
    %v278 = vld [vmem:[#allocation2 + $0x10] sm:$0x3]
    %282 = vrot.lane.b32.xlu0 %v276, 111
    %v283 = vpop.permute.xlu0 %282
    %284 = vrot.lane.b32.xlu0 %v277, 111
    %v285 = vpop.permute.xlu0 %284
    %286 = vrot.lane.b32.xlu0 %v278, 111
    %v287 = vpop.permute.xlu0 %286
    %v288 = vsel %vm134, %v283, %v285
    %v289 = vsel %vm134, %v285, %v287
    %292 = vst [vmem:[#allocation3 + $0x30] sm:$0x3] %v288
    %293 = vst [vmem:[#allocation3 + $0x38] sm:$0x3] %v289
    %v294 = vld [vmem:[#allocation2] sm:$0xc]
    %v295 = vld [vmem:[#allocation2 + $0x8] sm:$0xc]
    %v296 = vld [vmem:[#allocation2 + $0x10] sm:$0xc]
    %300 = vrot.lane.b32.xlu0 %v294, 111
    %v301 = vpop.permute.xlu0 %300
    %302 = vrot.lane.b32.xlu0 %v295, 111
    %v303 = vpop.permute.xlu0 %302
    %304 = vrot.lane.b32.xlu0 %v296, 111
    %v305 = vpop.permute.xlu0 %304
    %v306 = vsel %vm134, %v301, %v303
    %v307 = vsel %vm134, %v303, %v305
    %310 = vst [vmem:[#allocation3 + $0x30] sm:$0xc] %v306
    %311 = vst [vmem:[#allocation3 + $0x38] sm:$0xc] %v307
    %v312 = vld [vmem:[#allocation2] sm:$0xc]
    %v313 = vld [vmem:[#allocation2 + $0x8] sm:$0xc]
    %v314 = vld [vmem:[#allocation2 + $0x10] sm:$0xc]
    %v318 = vrot.slane %v312, 6
    %v319 = vrot.slane %v313, 6
    %v320 = vrot.slane %v314, 6
    %321 = vrot.lane.b32.xlu0 %v318, 126
    %v322 = vpop.permute.xlu0 %321
    %323 = vrot.lane.b32.xlu0 %v319, 126
    %v324 = vpop.permute.xlu0 %323
    %325 = vrot.lane.b32.xlu0 %v320, 126
    %v326 = vpop.permute.xlu0 %325
    %v327 = vsel %vm156, %v322, %v324
    %v328 = vsel %vm156, %v324, %v326
    %331 = vst [vmem:[#allocation3 + $0x30] sm:$0x30] %v327
    %332 = vst [vmem:[#allocation3 + $0x38] sm:$0x30] %v328
    %v333 = vld [vmem:[#allocation2] sm:$0x3]
    %v334 = vld [vmem:[#allocation2 + $0x8] sm:$0x3]
    %v335 = vld [vmem:[#allocation2 + $0x10] sm:$0x3]
    %v339 = vrot.slane %v333, 2
    %v340 = vrot.slane %v334, 2
    %v341 = vrot.slane %v335, 2
    %342 = vrot.lane.b32.xlu0 %v339, 110
    %v343 = vpop.permute.xlu0 %342
    %344 = vrot.lane.b32.xlu0 %v340, 110
    %v345 = vpop.permute.xlu0 %344
    %346 = vrot.lane.b32.xlu0 %v341, 110
    %v347 = vpop.permute.xlu0 %346
    %v348 = vsel %vm196, %v343, %v345
    %v349 = vsel %vm196, %v345, %v347
    %352 = vst [vmem:[#allocation3 + $0x30] sm:$0xc0] %v348
    %353 = vst [vmem:[#allocation3 + $0x38] sm:$0xc0] %v349
    %v354 = vld [vmem:[#allocation2] sm:$0xc]
    %v355 = vld [vmem:[#allocation2 + $0x8] sm:$0xc]
    %v356 = vld [vmem:[#allocation2 + $0x10] sm:$0xc]
    %v360 = vrot.slane %v354, 2
    %v361 = vrot.slane %v355, 2
    %v362 = vrot.slane %v356, 2
    %363 = vrot.lane.b32.xlu0 %v360, 110
    %v364 = vpop.permute.xlu0 %363
    %365 = vrot.lane.b32.xlu0 %v361, 110
    %v366 = vpop.permute.xlu0 %365
    %367 = vrot.lane.b32.xlu0 %v362, 110
    %v368 = vpop.permute.xlu0 %367
    %v369 = vsel %vm196, %v364, %v366
    %v370 = vsel %vm196, %v366, %v368
    %373 = vst [vmem:[#allocation3 + $0x50] sm:$0x3] %v369
    %374 = vst [vmem:[#allocation3 + $0x58] sm:$0x3] %v370
    %v375 = vld [vmem:[#allocation5] sm:$0xff]
    %v376 = vld [vmem:[#allocation3] sm:$0xff]
    %v377 = vld [vmem:[#allocation3 + $0x8] sm:$0xff]
    %v378 = vld [vmem:[#allocation3 + $0x10] sm:$0xff]
    %v379 = vld [vmem:[#allocation3 + $0x18] sm:$0xff]
    %v380 = vld [vmem:[#allocation3 + $0x20] sm:$0xff]
    %v381 = vld [vmem:[#allocation3 + $0x28] sm:$0xff]
    %v382 = vld [vmem:[#allocation3 + $0x30] sm:$0xff]
    %v383 = vld [vmem:[#allocation3 + $0x38] sm:$0xff]
    %v384 = vld [vmem:[#allocation3 + $0x40] sm:$0xff]
    %v385 = vld [vmem:[#allocation3 + $0x48] sm:$0xff]
    %v386 = vld [vmem:[#allocation3 + $0x50] sm:$0xff]
    %v387 = vld [vmem:[#allocation3 + $0x58] sm:$0xff]
    %vm388 = vcmask 195584
    %v390 = vsel %vm388, %v375, 0
    %392 = vmatprep.subr.mxu0 %v377
    %393 = vmatpush1.msra.mxu0 %v376
    %394 = vmatprep.subr.mxu0 %v381
    %395 = vmatpush1.msra.mxu0 %v380
    %396 = vmatprep.subr.mxu0 %v385
    %397 = vmatpush1.msra.mxu0 %v384
    %398 = vmatprep.subr.mxu0 0.0
    %399 = vmatpush1.msra.mxu0 0.0
    %400 = vmatprep.subr.mxu0 0.0
    %401 = vmatpush1.msra.mxu0 0.0
    %402 = vmatprep.subr.mxu0 0.0
    %403 = vmatpush1.msra.mxu0 0.0
    %404 = vmatprep.subr.mxu0 0.0
    %405 = vmatpush1.msra.mxu0 0.0
    %406 = vmatprep.subr.mxu0 0.0
    %407 = vmatpush1.msra.mxu0 0.0
    %408 = vmatprep.subr.mxu0 0.0
    %409 = vmatpush1.msra.mxu0 0.0
    %410 = vmatprep.subr.mxu0 0.0
    %411 = vmatpush1.msra.mxu0 0.0
    %412 = vmatprep.subr.mxu0 0.0
    %413 = vmatpush1.msra.mxu0 0.0
    %414 = vmatprep.subr.mxu0 0.0
    %415 = vmatpush1.msra.mxu0 0.0
    %416 = vmatprep.subr.mxu0 0.0
    %417 = vmatpush1.msra.mxu0 0.0
    %418 = vmatprep.subr.mxu0 0.0
    %419 = vmatpush1.msra.mxu0 0.0
    %420 = vmatprep.subr.mxu0 0.0
    %421 = vmatpush1.msra.mxu0 0.0
    %422 = vmatprep.subr.mxu0 0.0
    %423 = vmatpush1.msra.mxu0 0.0
    %424 = vmatprep.subr.mxu0 0.0
    %425 = vmatpush1.msra.mxu0 0.0
    %426 = vmatprep.subr.mxu0 0.0
    %427 = vmatpush1.msra.mxu0 0.0
    %428 = vmatprep.subr.mxu0 0.0
    %429 = vmatpush1.msra.mxu0 0.0
    %430 = vmatprep.subr.mxu0 0.0
    %431 = vmatpush1.msra.mxu0 0.0
    %432 = vmatprep.subr.mxu0 0.0
    %433 = vmatpush1.msra.mxu0 0.0
    %434 = vmatprep.subr.mxu0 0.0
    %435 = vmatpush1.msra.mxu0 0.0
    %436 = vmatprep.subr.mxu0 0.0
    %437 = vmatpush1.msra.mxu0 0.0
    %438 = vmatprep.subr.mxu0 0.0
    %439 = vmatpush1.msra.mxu0 0.0
    %440 = vmatprep.subr.mxu0 0.0
    %441 = vmatpush1.msra.mxu0 0.0
    %442 = vmatprep.subr.mxu0 0.0
    %443 = vmatpush1.msra.mxu0 0.0
    %444 = vmatprep.subr.mxu0 0.0
    %445 = vmatpush1.msra.mxu0 0.0
    %446 = vmatprep.subr.mxu0 0.0
    %447 = vmatpush1.msra.mxu0 0.0
    %448 = vmatprep.subr.mxu0 0.0
    %449 = vmatpush1.msra.mxu0 0.0
    %450 = vmatprep.subr.mxu0 0.0
    %451 = vmatpush1.msra.mxu0 0.0
    %452 = vmatprep.subr.mxu0 0.0
    %453 = vmatpush1.msra.mxu0 0.0
    %454 = vmatprep.subr.mxu0 0.0
    %455 = vmatpush1.msra.mxu0 0.0
    %456 = vmatprep.mubr.f32.mxu0 0.0
    %457 = vmatmul.mubr.f32.gmra.mrb[0].mxu0 %v390
    %v458 = vpop.f32.mrb[0].mxu0
    %v459 = vadd.f32 0.0, %v458
    %v460 = vpop.f32.mrb[0].mxu0
    %v461 = vadd.f32 0.0, %v460
    %462 = vdwg.mxu0
    %463 = vmatprep.subr.mxu0 %v379
    %464 = vmatpush1.msra.mxu0 %v378
    %465 = vmatprep.subr.mxu0 %v383
    %466 = vmatpush1.msra.mxu0 %v382
    %467 = vmatprep.subr.mxu0 %v387
    %468 = vmatpush1.msra.mxu0 %v386
    %469 = vmatprep.subr.mxu0 0.0
    %470 = vmatpush1.msra.mxu0 0.0
    %471 = vmatprep.subr.mxu0 0.0
    %472 = vmatpush1.msra.mxu0 0.0
    %473 = vmatprep.subr.mxu0 0.0
    %474 = vmatpush1.msra.mxu0 0.0
    %475 = vmatprep.subr.mxu0 0.0
    %476 = vmatpush1.msra.mxu0 0.0
    %477 = vmatprep.subr.mxu0 0.0
    %478 = vmatpush1.msra.mxu0 0.0
    %479 = vmatprep.subr.mxu0 0.0
    %480 = vmatpush1.msra.mxu0 0.0
    %481 = vmatprep.subr.mxu0 0.0
    %482 = vmatpush1.msra.mxu0 0.0
    %483 = vmatprep.subr.mxu0 0.0
    %484 = vmatpush1.msra.mxu0 0.0
    %485 = vmatprep.subr.mxu0 0.0
    %486 = vmatpush1.msra.mxu0 0.0
    %487 = vmatprep.subr.mxu0 0.0
    %488 = vmatpush1.msra.mxu0 0.0
    %489 = vmatprep.subr.mxu0 0.0
    %490 = vmatpush1.msra.mxu0 0.0
    %491 = vmatprep.subr.mxu0 0.0
    %492 = vmatpush1.msra.mxu0 0.0
    %493 = vmatprep.subr.mxu0 0.0
    %494 = vmatpush1.msra.mxu0 0.0
    %495 = vmatprep.subr.mxu0 0.0
    %496 = vmatpush1.msra.mxu0 0.0
    %497 = vmatprep.subr.mxu0 0.0
    %498 = vmatpush1.msra.mxu0 0.0
    %499 = vmatprep.subr.mxu0 0.0
    %500 = vmatpush1.msra.mxu0 0.0
    %501 = vmatprep.subr.mxu0 0.0
    %502 = vmatpush1.msra.mxu0 0.0
    %503 = vmatprep.subr.mxu0 0.0
    %504 = vmatpush1.msra.mxu0 0.0
    %505 = vmatprep.subr.mxu0 0.0
    %506 = vmatpush1.msra.mxu0 0.0
    %507 = vmatprep.subr.mxu0 0.0
    %508 = vmatpush1.msra.mxu0 0.0
    %509 = vmatprep.subr.mxu0 0.0
    %510 = vmatpush1.msra.mxu0 0.0
    %511 = vmatprep.subr.mxu0 0.0
    %512 = vmatpush1.msra.mxu0 0.0
    %513 = vmatprep.subr.mxu0 0.0
    %514 = vmatpush1.msra.mxu0 0.0
    %515 = vmatprep.subr.mxu0 0.0
    %516 = vmatpush1.msra.mxu0 0.0
    %517 = vmatprep.subr.mxu0 0.0
    %518 = vmatpush1.msra.mxu0 0.0
    %519 = vmatprep.subr.mxu0 0.0
    %520 = vmatpush1.msra.mxu0 0.0
    %521 = vmatprep.subr.mxu0 0.0
    %522 = vmatpush1.msra.mxu0 0.0
    %523 = vmatprep.subr.mxu0 0.0
    %524 = vmatpush1.msra.mxu0 0.0
    %525 = vmatprep.subr.mxu0 0.0
    %526 = vmatpush1.msra.mxu0 0.0
    %527 = vmatprep.mubr.f32.mxu0 0.0
    %528 = vmatmul.mubr.f32.gmra.mrb[0].mxu0 %v390
    %v529 = vpop.f32.mrb[0].mxu0
    %v530 = vadd.f32 0.0, %v529
    %v531 = vpop.f32.mrb[0].mxu0
    %v532 = vadd.f32 0.0, %v531
    %533 = vdwg.mxu0
    %v534 = vmax.f32 %v459, %v530
    %v535 = vmax.f32 %v461, %v532
    %v536 = vcvt.f32.s32.to.zero.pseudo %v534
    %v537 = vcvt.f32.s32.to.zero.pseudo %v535
    %538 = vst [vmem:[#allocation8] sm:$0xff] %v536
    %539 = vst [vmem:[#allocation8 + $0x8] sm:$0xff] %v537
    // Predicated region
    $region14: #{tpu_custom_call.1} parent=1 // pred_check
      _
    $region15: #{tpu_custom_call.1} parent=1 // pred_check_branch
      %541 = sbr.rel (0) target = $region17
    $region16: #{tpu_custom_call.1} parent=1 // pred_region
      %s543 = ssub.s32 256, 256
      %544 = vsyncadd [#allocation7], %s543
      %s546 = sshll.u32 [#allocation8], 4
      %s547 = int_to_ptr.vmem [resolvable:$true] %s546
      %549 = dma.vmem_to_hbm [thread:$0]  %s547, 256, %s2, [#allocation7]
    $region17: #{tpu_custom_call.1} parent=1 // pred_fallthru
      _
    // Predicated region
    $region18: #{tpu_custom_call.1} parent=1 // pred_check
      _
    $region19: #{tpu_custom_call.1} parent=1 // pred_check_branch
      %551 = sbr.rel (0) target = $region21
    $region20: #{tpu_custom_call.1} parent=1 // pred_region
      %552 = dma.done [#allocation7], 256
    $region21: #{tpu_custom_call.1} parent=1 // pred_fallthru
      _
    %553 = vsyncpa [#allocation6], 1
    %554 = vsyncpa [#allocation7], 1
  %555 = vsyncmov [#allocation4]
  %s556 = vpop.sfrf %555
  %p557 = scmp.eq.s32.totalorder %s556, 0
  %p558 = pneg %p557
  %560 = shalt.err (%p558)

</llo_original>
